<compile_context>
chip_gen: v7x
topology: tpu7x:2x2x1
jax: 0.10.0
libtpu: 0.0.40
codegen_flags: <defaults>
</compile_context>

<pallas_src>
import functools
import math

import jax
import jax.numpy as jnp
from jax.experimental import pallas as pl
from jax.experimental.pallas import tpu as pltpu

BN_EPS = 1e-5
TEMP_C = 1.0
TEMP_L = 1.0

_TM_MM = 256   # matmul row tile
_TN_MM = 256   # matmul col tile
_TM_EW = 512   # elementwise row tile


def _row_tile(m, cap):
    return m if m <= cap else cap


def _col_tile(n, cap):
    return n if n <= cap else cap


# ----------------------------------------------------------------------------
# Pallas kernels
# ----------------------------------------------------------------------------
def _mm_stats_kernel(a_ref, b_ref, y_ref, s_ref, ss_ref, *, m_total):
    """Tiled bf16 matmul with fused per-column sum / sum-of-squares accumulation.

    Grid = (N tiles [parallel], M tiles [arbitrary, innermost]); the stats
    outputs are resident across the M axis (accumulator pattern)."""
    i = pl.program_id(1)                         # M tile index (reduction axis)
    tm = y_ref.shape[0]

    y = jnp.dot(a_ref[...], b_ref[...], preferred_element_type=jnp.float32)
    y_ref[...] = y

    # mask rows past the true M (edge tile) so stats stay exact
    row = jax.lax.broadcasted_iota(jnp.int32, (tm, 1), 0) + i * tm
    yv = jnp.where(row < m_total, y, 0.0)
    ps = jnp.sum(yv, axis=0, keepdims=True)
    pss = jnp.sum(yv * yv, axis=0, keepdims=True)

    @pl.when(i == 0)
    def _():
        s_ref[...] = ps
        ss_ref[...] = pss

    @pl.when(i != 0)
    def _():
        s_ref[...] += ps
        ss_ref[...] += pss


def pallas_matmul_stats(a, b):
    """a: [M, K] bf16, b: [K, N] bf16 -> (y f32 [M, N], colsum [1, N], colsumsq [1, N])."""
    m, k = a.shape
    _, n = b.shape
    tm = _row_tile(m, _TM_MM)
    tn = _col_tile(n, _TN_MM)
    grid = (pl.cdiv(n, tn), pl.cdiv(m, tm))      # M (stats reduction) innermost
    return pl.pallas_call(
        functools.partial(_mm_stats_kernel, m_total=m),
        out_shape=(jax.ShapeDtypeStruct((m, n), jnp.float32),
                   jax.ShapeDtypeStruct((1, n), jnp.float32),
                   jax.ShapeDtypeStruct((1, n), jnp.float32)),
        grid=grid,
        in_specs=[pl.BlockSpec((tm, k), lambda j, i: (i, 0)),
                  pl.BlockSpec((k, tn), lambda j, i: (0, j))],
        out_specs=(pl.BlockSpec((tm, tn), lambda j, i: (i, j)),
                   pl.BlockSpec((1, tn), lambda j, i: (0, j)),
                   pl.BlockSpec((1, tn), lambda j, i: (0, j))),
        compiler_params=pltpu.CompilerParams(
            dimension_semantics=("parallel", "arbitrary")),
    )(a, b)


def _mm_epilogue_kernel(a_ref, b_ref, s_ref, bias_ref, o_ref, *, relu):
    """Tiled bf16 matmul with fused per-channel scale/bias (+optional ReLU)."""
    y = jnp.dot(a_ref[...], b_ref[...], preferred_element_type=jnp.float32)
    y = y * s_ref[...] + bias_ref[...]
    if relu:
        y = jnp.maximum(y, 0.0)
    o_ref[...] = y


def pallas_matmul_epilogue(a, b, scale, bias, *, relu):
    m, k = a.shape
    _, n = b.shape
    tm = _row_tile(m, _TM_MM)
    tn = _col_tile(n, _TN_MM)
    grid = (pl.cdiv(m, tm), pl.cdiv(n, tn))
    return pl.pallas_call(
        functools.partial(_mm_epilogue_kernel, relu=relu),
        out_shape=jax.ShapeDtypeStruct((m, n), jnp.float32),
        grid=grid,
        in_specs=[pl.BlockSpec((tm, k), lambda i, j: (i, 0)),
                  pl.BlockSpec((k, tn), lambda i, j: (0, j)),
                  pl.BlockSpec((1, tn), lambda i, j: (0, j)),
                  pl.BlockSpec((1, tn), lambda i, j: (0, j))],
        out_specs=pl.BlockSpec((tm, tn), lambda i, j: (i, j)),
        compiler_params=pltpu.CompilerParams(
            dimension_semantics=("parallel", "parallel")),
    )(a, b, scale, bias)


def _affine_kernel(y_ref, s_ref, b_ref, o_ref, *, relu):
    y = y_ref[...] * s_ref[...] + b_ref[...]
    if relu:
        y = jnp.maximum(y, 0.0)
    o_ref[...] = y


def _affine_res_kernel(y_ref, s_ref, b_ref, r_ref, o_ref, *, relu):
    y = y_ref[...] * s_ref[...] + b_ref[...] + r_ref[...]
    if relu:
        y = jnp.maximum(y, 0.0)
    o_ref[...] = y


def pallas_affine(y, scale, bias, *, relu):
    m, c = y.shape
    tm = _row_tile(m, _TM_EW)
    grid = (pl.cdiv(m, tm),)
    return pl.pallas_call(
        functools.partial(_affine_kernel, relu=relu),
        out_shape=jax.ShapeDtypeStruct((m, c), jnp.float32),
        grid=grid,
        in_specs=[pl.BlockSpec((tm, c), lambda i: (i, 0)),
                  pl.BlockSpec((1, c), lambda i: (0, 0)),
                  pl.BlockSpec((1, c), lambda i: (0, 0))],
        out_specs=pl.BlockSpec((tm, c), lambda i: (i, 0)),
        compiler_params=pltpu.CompilerParams(dimension_semantics=("parallel",)),
    )(y, scale, bias)


def pallas_affine_residual(y, scale, bias, residual, *, relu):
    m, c = y.shape
    tm = _row_tile(m, _TM_EW)
    grid = (pl.cdiv(m, tm),)
    return pl.pallas_call(
        functools.partial(_affine_res_kernel, relu=relu),
        out_shape=jax.ShapeDtypeStruct((m, c), jnp.float32),
        grid=grid,
        in_specs=[pl.BlockSpec((tm, c), lambda i: (i, 0)),
                  pl.BlockSpec((1, c), lambda i: (0, 0)),
                  pl.BlockSpec((1, c), lambda i: (0, 0)),
                  pl.BlockSpec((tm, c), lambda i: (i, 0))],
        out_specs=pl.BlockSpec((tm, c), lambda i: (i, 0)),
        compiler_params=pltpu.CompilerParams(dimension_semantics=("parallel",)),
    )(y, scale, bias, residual)


def _max9_kernel(a0, a1, a2, a3, a4, a5, a6, a7, a8, o_ref):
    m = a0[...]
    for r in (a1, a2, a3, a4, a5, a6, a7, a8):
        m = jnp.maximum(m, r[...])
    o_ref[...] = m


def pallas_max9(views):
    m, c = views[0].shape
    tm = _row_tile(m, _TM_EW)
    grid = (pl.cdiv(m, tm),)
    spec = pl.BlockSpec((tm, c), lambda i: (i, 0))
    return pl.pallas_call(
        _max9_kernel,
        out_shape=jax.ShapeDtypeStruct((m, c), jnp.float32),
        grid=grid,
        in_specs=[spec] * 9,
        out_specs=spec,
        compiler_params=pltpu.CompilerParams(dimension_semantics=("parallel",)),
    )(*views)


# ----------------------------------------------------------------------------
# JAX glue: im2col, ConvLayer / BasicBlock / ResNet forward
# ----------------------------------------------------------------------------
def im2col(x, kh, kw, stride, pad):
    """Extract conv patches as a bf16 [N*OH*OW, KH*KW*Cin] matrix (NHWC input)."""
    # TODO(synk): move patch extraction into the Pallas pipeline (tap-indexed
    # BlockSpecs / manual DMA gather) to avoid the 9x/49x HBM expansion.
    n, h, w, c = x.shape
    x = x.astype(jnp.bfloat16)                       # halve im2col HBM traffic
    xp = jnp.pad(x, ((0, 0), (pad, pad), (pad, pad), (0, 0)))
    oh = (h + 2 * pad - kh) // stride + 1
    ow = (w + 2 * pad - kw) // stride + 1
    cols = []
    for i in range(kh):
        for j in range(kw):
            cols.append(xp[:, i:i + stride * oh:stride, j:j + stride * ow:stride, :])
    a = jnp.stack(cols, axis=3)                      # [N, OH, OW, KH*KW, C]
    return a.reshape(n * oh * ow, kh * kw * c), (n, oh, ow)


def conv_layer_forward(x, p, *, relu, residual=None):
    """Conv2d (no bias) -> optional BatchNorm (batch stats) -> channel Mask
    (-> optional residual add) -> optional ReLU, all on fused Pallas kernels."""
    a, (n, oh, ow) = im2col(x, p["kh"], p["kw"], p["stride"], p["pad"])
    w = p["w_mat"]                                   # bf16 [K, Cout]
    m = a.shape[0]
    cout = w.shape[1]
    mask = p["mask"][None, :]                        # f32 (1, Cout)

    if p["use_bn"]:
        y, s, ss = pallas_matmul_stats(a, w)         # matmul + fused col stats
        mean = s / m
        # TODO(synk): E[x^2]-mean^2 can cancel for very large activations;
        # switch to a two-pass / Welford reduction if that becomes an issue.
        var = jnp.maximum(ss / m - mean * mean, 0.0)
        inv = jax.lax.rsqrt(var + BN_EPS)
        scale = inv * mask                           # gamma = 1, mask folded in
        bias = -mean * inv * mask                    # beta  = 0
        if residual is not None:
            out = pallas_affine_residual(y, scale, bias,
                                         residual.reshape(m, cout), relu=relu)
        else:
            out = pallas_affine(y, scale, bias, relu=relu)
    else:
        # No BatchNorm: fold the channel mask straight into the matmul epilogue.
        assert residual is None
        out = pallas_matmul_epilogue(a, w, mask.astype(jnp.float32),
                                     jnp.zeros((1, cout), jnp.float32), relu=relu)
    return out.reshape(n, oh, ow, cout)


def basic_block_forward(x, bp):
    out1 = conv_layer_forward(x, bp["conv1"], relu=True)
    if bp["downsample"] is not None:
        identity = conv_layer_forward(x, bp["downsample"], relu=False)
    else:
        identity = x
    # conv2: BN + mask + residual add + ReLU fused into one epilogue pass
    out = conv_layer_forward(out1, bp["conv2"], relu=True, residual=identity)
    return out


def maxpool_3x3_s2_p1(x):
    n, h, w, c = x.shape
    xp = jnp.pad(x, ((0, 0), (1, 1), (1, 1), (0, 0)), constant_values=-jnp.inf)
    oh = (h + 2 - 3) // 2 + 1
    ow = (w + 2 - 3) // 2 + 1
    views = [xp[:, i:i + 2 * oh:2, j:j + 2 * ow:2, :].reshape(n * oh * ow, c)
             for i in range(3) for j in range(3)]
    return pallas_max9(views).reshape(n, oh, ow, c)


def resnet_forward(x_nchw, params, active_task=0):
    # TODO(synk): accept NHWC inputs directly to avoid this one-time transpose copy.
    x = jnp.transpose(x_nchw, (0, 2, 3, 1)).astype(jnp.float32)   # NCHW -> NHWC
    x = conv_layer_forward(x, params["conv1"], relu=True)          # conv1 + BN + mask + ReLU
    x = maxpool_3x3_s2_p1(x)

    # layer-level policy: sigmoid(temp_l * logits) then hardtanh to [0,1]
    logits = params["layer_logits"][active_task]                   # (8,)
    policy = jnp.clip(jax.nn.sigmoid(TEMP_L * logits), 0.0, 1.0)
    pmix = policy[active_task]                 # matches reference: policy[self.active_task]

    for layer in params["layers"]:
        for i, bp in enumerate(layer):
            x = basic_block_forward(x, bp)
            if i != 0:
                # x = policy * block(x) + x * (1 - policy)  (block applied again)
                y = basic_block_forward(x, bp)
                x = pmix * y + (1.0 - pmix) * x

    x = jnp.mean(x, axis=(1, 2))                                   # adaptive avg pool -> [N, 512]
    w_fc, b_fc = params["fc"][active_task]
    # FC head: bias folded into a single Pallas matmul epilogue (no extra affine pass)
    y = pallas_matmul_epilogue(
        x.astype(jnp.bfloat16), w_fc.T.astype(jnp.bfloat16),
        jnp.ones((1, w_fc.shape[0]), jnp.float32),
        b_fc[None, :].astype(jnp.float32), relu=False)
    return y


# ----------------------------------------------------------------------------
# Deterministic parameter init (matches the shapes implied by __init__)
# ----------------------------------------------------------------------------
def _init_conv_layer(key, cin, cout, k, stride, pad, use_bn):
    std = math.sqrt(2.0 / (cout * k * k))             # kaiming_normal_, fan_out, relu
    w = jax.random.normal(key, (cout, cin, k, k), jnp.float32) * std
    # pre-reshape to im2col matrix and store bf16 for the MXU
    w_mat = jnp.transpose(w, (2, 3, 1, 0)).reshape(k * k * cin, cout).astype(jnp.bfloat16)
    # Mask module: logits = 0 -> hardtanh(sigmoid(temp_c * 0), 0, 1) = 0.5 per channel
    mask = jnp.clip(jax.nn.sigmoid(TEMP_C * jnp.zeros((cout,), jnp.float32)), 0.0, 1.0)
    return dict(w_mat=w_mat, kh=k, kw=k, stride=stride, pad=pad, use_bn=use_bn, mask=mask)


def make_params(key, layers=(2, 2, 2, 2), task_groups=((0, 1, 2), (3, 4))):
    keys = iter(jax.random.split(key, 256))
    params = {}
    params["conv1"] = _init_conv_layer(next(keys), 3, 64, 7, 2, 3, True)

    inplanes = 64
    plan = [(64, layers[0], 1), (128, layers[1], 2), (256, layers[2], 2), (512, layers[3], 2)]
    all_layers = []
    for planes, nblocks, stride in plan:
        blks = []
        for b in range(nblocks):
            s = stride if b == 0 else 1
            ds = None
            if b == 0 and (s != 1 or inplanes != planes):
                # downsample: ConvLayer(k=1, stride=s) with NO norm_layer (conv + Mask only)
                ds = _init_conv_layer(next(keys), inplanes, planes, 1, s, 0, False)
            blk = dict(
                conv1=_init_conv_layer(next(keys), inplanes, planes, 3, s, 1, True),
                conv2=_init_conv_layer(next(keys), planes, planes, 3, 1, 1, True),
                downsample=ds,
            )
            inplanes = planes
            blks.append(blk)
        all_layers.append(blks)
    params["layers"] = all_layers

    fcs = []
    for tg in task_groups:
        n_out = len(tg)
        k_w, k_b = jax.random.split(next(keys))
        bound = 1.0 / math.sqrt(512.0)
        w = jax.random.uniform(k_w, (n_out, 512), jnp.float32, -bound, bound)
        b = jax.random.uniform(k_b, (n_out,), jnp.float32, -bound, bound)
        fcs.append((w, b))
    params["fc"] = fcs

    # reset_logits(): 8 tasks x 8 layer-logits, all zeros
    params["layer_logits"] = jnp.zeros((8, 8), jnp.float32)
    return params


if __name__ == "__main__":
    key = jax.random.PRNGKey(0)
    kx, kp = jax.random.split(key)
    # PyTorch-style NCHW input, 3 channels (conv1 expects 3), small spatial.
    x = jax.random.normal(kx, (2, 3, 16, 16), jnp.float32)
    params = make_params(kp, layers=(2, 2, 2, 2), task_groups=((0, 1, 2), (3, 4)))
    out = resnet_forward(x, params, active_task=0)
    jax.block_until_ready(out)
    assert out.shape == (2, 3), out.shape
    print("KERNEL_OK")
</pallas_src>

<mosaic_0001>
module attributes {stable_mosaic.version = 11 : i64} {
  func.func @_mm_stats_kernel(%arg0: i32, %arg1: i32, %arg2: memref<128x147xbf16, #tpu.memory_space<vmem>>, %arg3: memref<147x64xbf16, #tpu.memory_space<vmem>>, %arg4: memref<128x64xf32, #tpu.memory_space<vmem>>, %arg5: memref<1x64xf32, #tpu.memory_space<vmem>>, %arg6: memref<1x64xf32, #tpu.memory_space<vmem>>) attributes {dimension_semantics = [#tpu.dimension_semantics<parallel>, #tpu.dimension_semantics<arbitrary>], iteration_bounds = array<i64: 1, 1>, scalar_prefetch = 0 : i64, scratch_operands = 0 : i64, tpu.core_type = #tpu.core_type<tc>, window_params = [{transform_indices = @transform_0, window_bounds = array<i64: 128, 147>}, {transform_indices = @transform_1, window_bounds = array<i64: 147, 64>}, {transform_indices = @transform_2, window_bounds = array<i64: 128, 64>}, {transform_indices = @transform_3, window_bounds = array<i64: 1, 64>}, {transform_indices = @transform_4, window_bounds = array<i64: 1, 64>}]} {
    %c0 = arith.constant 0 : index
    %c0_0 = arith.constant 0 : index
    %0 = vector.load %arg2[%c0, %c0_0] : memref<128x147xbf16, #tpu.memory_space<vmem>>, vector<128x147xbf16>
    %c0_1 = arith.constant 0 : index
    %c0_2 = arith.constant 0 : index
    %1 = vector.load %arg3[%c0_1, %c0_2] : memref<147x64xbf16, #tpu.memory_space<vmem>>, vector<147x64xbf16>
    %cst = arith.constant dense<0.000000e+00> : vector<128x64xf32>
    %2 = tpu.matmul %0, %1, %cst {dimension_numbers = #tpu.dot_dimension_numbers<[1], [0], [0], [1], [0, 0, 1, 1], [], []>} : vector<128x147xbf16>, vector<147x64xbf16>, vector<128x64xf32> -> vector<128x64xf32>
    %c0_3 = arith.constant 0 : index
    %c0_4 = arith.constant 0 : index
    %3 = vector.load %arg4[%c0_3, %c0_4] : memref<128x64xf32, #tpu.memory_space<vmem>>, vector<128x64xf32>
    tpu.vector_store %arg4[%c0_3, %c0_4], %2 {strides = array<i32>} : memref<128x64xf32, #tpu.memory_space<vmem>>, vector<128x64xf32>,
    %4 = tpu.iota {dimensions = array<i32: 0>} : vector<128x1xi32>
    %c128_i32 = arith.constant 128 : i32
    %5 = arith.muli %arg1, %c128_i32 : i32
    %6 = vector.broadcast %5 : i32 to vector<128x1xi32>
    %7 = arith.addi %4, %6 : vector<128x1xi32>
    %c128_i32_5 = arith.constant 128 : i32
    %8 = vector.broadcast %c128_i32_5 : i32 to vector<128x1xi32>
    %9 = arith.cmpi slt, %7, %8 : vector<128x1xi32>
    %cst_6 = arith.constant 0.000000e+00 : f32
    %10 = vector.shape_cast %9 : vector<128x1xi1> to vector<128x1xi1>
    %11 = vector.broadcast %10 : vector<128x1xi1> to vector<128x64xi1>
    %12 = vector.broadcast %cst_6 : f32 to vector<128x64xf32>
    %13 = arith.select %11, %2, %12 : vector<128x64xi1>, vector<128x64xf32>
    %cst_7 = arith.constant dense<0.000000e+00> : vector<64xf32>
    %14 = vector.multi_reduction <add>, %13, %cst_7 [0] : vector<128x64xf32> to vector<64xf32>
    %15 = vector.shape_cast %14 : vector<64xf32> to vector<1x64xf32>
    %16 = arith.mulf %13, %13 : vector<128x64xf32>
    %cst_8 = arith.constant dense<0.000000e+00> : vector<64xf32>
    %17 = vector.multi_reduction <add>, %16, %cst_8 [0] : vector<128x64xf32> to vector<64xf32>
    %18 = vector.shape_cast %17 : vector<64xf32> to vector<1x64xf32>
    %c0_i32 = arith.constant 0 : i32
    %19 = arith.cmpi eq, %arg1, %c0_i32 : i32
    %20 = arith.extui %19 : i1 to i32
    %c0_i32_9 = arith.constant 0 : i32
    %21 = arith.cmpi ne, %20, %c0_i32_9 : i32
    scf.if %21 {
      %c0_12 = arith.constant 0 : index
      %c0_13 = arith.constant 0 : index
      %25 = vector.load %arg5[%c0_12, %c0_13] : memref<1x64xf32, #tpu.memory_space<vmem>>, vector<1x64xf32>
      tpu.vector_store %arg5[%c0_12, %c0_13], %15 {strides = array<i32>} : memref<1x64xf32, #tpu.memory_space<vmem>>, vector<1x64xf32>,
      %c0_14 = arith.constant 0 : index
      %c0_15 = arith.constant 0 : index
      %26 = vector.load %arg6[%c0_14, %c0_15] : memref<1x64xf32, #tpu.memory_space<vmem>>, vector<1x64xf32>
      tpu.vector_store %arg6[%c0_14, %c0_15], %18 {strides = array<i32>} : memref<1x64xf32, #tpu.memory_space<vmem>>, vector<1x64xf32>,
    } else {
    }
    %c0_i32_10 = arith.constant 0 : i32
    %22 = arith.cmpi ne, %arg1, %c0_i32_10 : i32
    %23 = arith.extui %22 : i1 to i32
    %c0_i32_11 = arith.constant 0 : i32
    %24 = arith.cmpi ne, %23, %c0_i32_11 : i32
    scf.if %24 {
      %c0_12 = arith.constant 0 : index
      %c0_13 = arith.constant 0 : index
      %25 = vector.load %arg5[%c0_12, %c0_13] : memref<1x64xf32, #tpu.memory_space<vmem>>, vector<1x64xf32>
      %26 = arith.addf %25, %15 : vector<1x64xf32>
      %c0_14 = arith.constant 0 : index
      %c0_15 = arith.constant 0 : index
      %27 = vector.load %arg5[%c0_14, %c0_15] : memref<1x64xf32, #tpu.memory_space<vmem>>, vector<1x64xf32>
      tpu.vector_store %arg5[%c0_14, %c0_15], %26 {strides = array<i32>} : memref<1x64xf32, #tpu.memory_space<vmem>>, vector<1x64xf32>,
      %c0_16 = arith.constant 0 : index
      %c0_17 = arith.constant 0 : index
      %28 = vector.load %arg6[%c0_16, %c0_17] : memref<1x64xf32, #tpu.memory_space<vmem>>, vector<1x64xf32>
      %29 = arith.addf %28, %18 : vector<1x64xf32>
      %c0_18 = arith.constant 0 : index
      %c0_19 = arith.constant 0 : index
      %30 = vector.load %arg6[%c0_18, %c0_19] : memref<1x64xf32, #tpu.memory_space<vmem>>, vector<1x64xf32>
      tpu.vector_store %arg6[%c0_18, %c0_19], %29 {strides = array<i32>} : memref<1x64xf32, #tpu.memory_space<vmem>>, vector<1x64xf32>,
    } else {
    }
    return
  }
  func.func @transform_0(%arg0: i32, %arg1: i32) -> (i32, i32) {
    %c0_i32 = arith.constant 0 : i32
    %c0_i32_0 = arith.constant 0 : i32
    return %arg1, %c0_i32 : i32, i32
  }
  func.func @transform_1(%arg0: i32, %arg1: i32) -> (i32, i32) {
    %c0_i32 = arith.constant 0 : i32
    %c0_i32_0 = arith.constant 0 : i32
    return %c0_i32, %arg0 : i32, i32
  }
  func.func @transform_2(%arg0: i32, %arg1: i32) -> (i32, i32) {
    %c0_i32 = arith.constant 0 : i32
    return %arg1, %arg0 : i32, i32
  }
  func.func @transform_3(%arg0: i32, %arg1: i32) -> (i32, i32) {
    %c0_i32 = arith.constant 0 : i32
    %c0_i32_0 = arith.constant 0 : i32
    return %c0_i32, %arg0 : i32, i32
  }
  func.func @transform_4(%arg0: i32, %arg1: i32) -> (i32, i32) {
    %c0_i32 = arith.constant 0 : i32
    %c0_i32_0 = arith.constant 0 : i32
    return %c0_i32, %arg0 : i32, i32
  }
}

</mosaic_0001>

<llo_original>
// kernel: tpu_custom_call.1
$region0: #{tpu_custom_call.1}
  #allocation0 [shape = 'u32[]', space=smem, size = 0x4, offset = 0x4, fixed_abs, tag = 'smem constant byte address 0x4 - core index']
  #allocation1 [shape = 'u32[144,128]{1,0:T(1,128)}', space=vmem, size = 0x12000, scoped, tag = 'internal scratch']
  %s0 = inlined_call_operand.vmem [shape: bf16[128,147], index: 0, kind: input, shape index: {}]
  %s1 = inlined_call_operand.vmem [shape: bf16[147,64], index: 1, kind: input, shape index: {}]
  %s2 = inlined_call_operand.vmem [shape: f32[128,64], index: 2, kind: output, shape index: {0}]
  %s3 = inlined_call_operand.hbm [shape: f32[1,64], index: 3, kind: output, shape index: {1}]
  %s4 = inlined_call_operand.hbm [shape: f32[1,64], index: 4, kind: output, shape index: {2}]
  %5 = xla_tuple %s2, %s3, %s4
  %s6 = sld [smem:[#allocation0]]
  $region42: #{tpu_custom_call.1} parent=0
    _
  %s8 = ssub.s32 1, %s6
  %s9 = scalar_select 0, %s8, %s6
  $region1: #{tpu_custom_call.1} parent=0
    #allocation2 [shape = 'u8[512]{0}', space=vmem, size = 0x400, scoped, tag = 'output window, operand 1, single buffered']
    #allocation3 [shape = 's32[1]{0}', space=sflag, size = 0x4, scoped, tag = 'scoped memory for tpu_custom_call.1']
    #allocation4 [shape = 'u8[512]{0}', space=vmem, size = 0x400, scoped, tag = 'output window, operand 2, single buffered']
    #allocation5 [shape = 's32[1]{0}', space=sflag, size = 0x4, scoped, tag = 'scoped memory for tpu_custom_call.1']
    %10 = vsyncpa [#allocation3], 0
    %11 = vsyncpa [#allocation5], 0
    // Predicated region
    $region2: #{tpu_custom_call.1} parent=1 // pred_check
      _
    $region3: #{tpu_custom_call.1} parent=1 // pred_check_branch
      %13 = sbr.rel (0) target = $region5
    $region4: #{tpu_custom_call.1} parent=1 // pred_region
      _
    $region5: #{tpu_custom_call.1} parent=1 // pred_fallthru
      _
    // Predicated region
    $region6: #{tpu_custom_call.1} parent=1 // pred_check
      _
    $region7: #{tpu_custom_call.1} parent=1 // pred_check_branch
      %15 = sbr.rel (0) target = $region9
    $region8: #{tpu_custom_call.1} parent=1 // pred_region
      _
    $region9: #{tpu_custom_call.1} parent=1 // pred_fallthru
      _
    %v17 = vld [vmem:[%s0] sm:$0xff]
    %v18 = vld [vmem:[%s0 + $0x8] sm:$0xff]
    %v19 = vld [vmem:[%s0 + $0x10] sm:$0xff]
    %v20 = vld [vmem:[%s0 + $0x18] sm:$0xff]
    %v21 = vld [vmem:[%s0 + $0x20] sm:$0xff]
    %v22 = vld [vmem:[%s0 + $0x28] sm:$0xff]
    %v23 = vld [vmem:[%s0 + $0x30] sm:$0xff]
    %v24 = vld [vmem:[%s0 + $0x38] sm:$0xff]
    %v25 = vld [vmem:[%s0 + $0x40] sm:$0xff]
    %v26 = vld [vmem:[%s0 + $0x48] sm:$0xff]
    %v27 = vld [vmem:[%s0 + $0x50] sm:$0xff]
    %v28 = vld [vmem:[%s0 + $0x58] sm:$0xff]
    %v29 = vld [vmem:[%s0 + $0x60] sm:$0xff]
    %v30 = vld [vmem:[%s0 + $0x68] sm:$0xff]
    %v31 = vld [vmem:[%s0 + $0x70] sm:$0xff]
    %v32 = vld [vmem:[%s0 + $0x78] sm:$0xff]
    %v33 = vld [vmem:[%s1] sm:$0xf]
    %v34 = vld [vmem:[%s1 + $0x4] sm:$0xf]
    %v35 = vld [vmem:[%s1 + $0x8] sm:$0xf]
    %v36 = vld [vmem:[%s1 + $0xc] sm:$0xf]
    %v37 = vld [vmem:[%s1 + $0x10] sm:$0xf]
    %v38 = vld [vmem:[%s1 + $0x14] sm:$0xf]
    %v39 = vld [vmem:[%s1 + $0x18] sm:$0xf]
    %v40 = vld [vmem:[%s1 + $0x1c] sm:$0xf]
    %v41 = vld [vmem:[%s1 + $0x20] sm:$0xf]
    %v42 = vld [vmem:[%s1 + $0x24] sm:$0xf]
    %v43 = vld [vmem:[%s1 + $0x28] sm:$0xf]
    %v44 = vld [vmem:[%s1 + $0x2c] sm:$0xf]
    %v45 = vld [vmem:[%s1 + $0x30] sm:$0xf]
    %v46 = vld [vmem:[%s1 + $0x34] sm:$0xf]
    %v47 = vld [vmem:[%s1 + $0x38] sm:$0xf]
    %v48 = vld [vmem:[%s1 + $0x3c] sm:$0xf]
    %v49 = vld [vmem:[%s1 + $0x40] sm:$0xf]
    %v50 = vld [vmem:[%s1 + $0x44] sm:$0xf]
    %v51 = vld [vmem:[%s1 + $0x48] sm:$0x3]
    %v68 = vunpack.c.l.b16 %v17
    %v69 = vunpack.c.h.b16 %v17
    %v70 = vunpack.c.l.b16 %v18
    %v71 = vunpack.c.h.b16 %v18
    %v72 = vunpack.c.l.b16 %v19
    %v73 = vunpack.c.h.b16 %v19
    %v74 = vunpack.c.l.b16 %v20
    %v75 = vunpack.c.h.b16 %v20
    %v76 = vunpack.c.l.b16 %v21
    %v77 = vunpack.c.h.b16 %v21
    %v78 = vunpack.c.l.b16 %v22
    %v79 = vunpack.c.h.b16 %v22
    %v80 = vunpack.c.l.b16 %v23
    %v81 = vunpack.c.h.b16 %v23
    %v82 = vunpack.c.l.b16 %v24
    %v83 = vunpack.c.h.b16 %v24
    %v84 = vunpack.c.l.b16 %v25
    %v85 = vunpack.c.h.b16 %v25
    %v86 = vunpack.c.l.b16 %v26
    %v87 = vunpack.c.h.b16 %v26
    %v88 = vunpack.c.l.b16 %v27
    %v89 = vunpack.c.h.b16 %v27
    %v90 = vunpack.c.l.b16 %v28
    %v91 = vunpack.c.h.b16 %v28
    %v92 = vunpack.c.l.b16 %v29
    %v93 = vunpack.c.h.b16 %v29
    %v94 = vunpack.c.l.b16 %v30
    %v95 = vunpack.c.h.b16 %v30
    %v96 = vunpack.c.l.b16 %v31
    %v97 = vunpack.c.h.b16 %v31
    %v98 = vunpack.c.l.b16 %v32
    %v99 = vunpack.c.h.b16 %v32
    %v100 = vpack.c.b16 %v70, %v68
    %v101 = vpack.c.b16 %v71, %v69
    %v102 = vpack.c.b16 %v74, %v72
    %v103 = vpack.c.b16 %v75, %v73
    %v104 = vpack.c.b16 %v78, %v76
    %v105 = vpack.c.b16 %v79, %v77
    %v106 = vpack.c.b16 %v82, %v80
    %v107 = vpack.c.b16 %v83, %v81
    %v108 = vpack.c.b16 %v86, %v84
    %v109 = vpack.c.b16 %v87, %v85
    %v110 = vpack.c.b16 %v90, %v88
    %v111 = vpack.c.b16 %v91, %v89
    %v112 = vpack.c.b16 %v94, %v92
    %v113 = vpack.c.b16 %v95, %v93
    %v114 = vpack.c.b16 %v98, %v96
    %v115 = vpack.c.b16 %v99, %v97
    %v143 = vunpack.c.l.b16 %v33
    %v144 = vunpack.c.l.b16 %v34
    %v145 = vunpack.c.l.b16 %v35
    %v146 = vunpack.c.l.b16 %v36
    %v147 = vunpack.c.l.b16 %v37
    %v148 = vunpack.c.l.b16 %v38
    %v149 = vunpack.c.l.b16 %v39
    %v150 = vunpack.c.l.b16 %v40
    %v151 = vunpack.c.l.b16 %v41
    %v152 = vunpack.c.l.b16 %v42
    %v153 = vunpack.c.l.b16 %v43
    %v154 = vunpack.c.l.b16 %v44
    %v155 = vunpack.c.l.b16 %v45
    %v156 = vunpack.c.l.b16 %v46
    %v157 = vunpack.c.l.b16 %v47
    %v158 = vunpack.c.l.b16 %v48
    %v159 = vunpack.c.l.b16 %v49
    %v160 = vunpack.c.l.b16 %v50
    %v161 = vunpack.c.l.b16 %v51
    %v162 = vpack.c.b16 %v144, %v143
    %v163 = vpack.c.b16 %v146, %v145
    %v164 = vpack.c.b16 %v148, %v147
    %v165 = vpack.c.b16 %v150, %v149
    %v166 = vpack.c.b16 %v152, %v151
    %v167 = vpack.c.b16 %v154, %v153
    %v168 = vpack.c.b16 %v156, %v155
    %v169 = vpack.c.b16 %v158, %v157
    %v170 = vpack.c.b16 %v160, %v159
    %v171 = vpack.c.b16 %v161, %v161
    %vm181 = vcmask 154624
    %v183 = vsel %vm181, %v101, 0
    %v186 = vsel %vm181, %v103, 0
    %v189 = vsel %vm181, %v105, 0
    %v192 = vsel %vm181, %v107, 0
    %v195 = vsel %vm181, %v109, 0
    %v198 = vsel %vm181, %v111, 0
    %v201 = vsel %vm181, %v113, 0
    %v204 = vsel %vm181, %v115, 0
    %vm206 = vcmask 1040384
    %vm207 = vcmask 1041408
    %v208 = vsel %vm206, 4294967295, 65535
    %v209 = vsel %vm207, %v208, 0
    %v211 = vand.u32 %v171, %v209
    %213 = vmatprep.subr.bf16.mxu0 0
    %214 = vmatpush1.bf16.msra.mxu0 %v162
    %215 = vmatprep.subr.bf16.mxu0 0
    %216 = vmatpush1.bf16.msra.mxu0 %v163
    %217 = vmatprep.subr.bf16.mxu0 0
    %218 = vmatpush1.bf16.msra.mxu0 %v164
    %219 = vmatprep.subr.bf16.mxu0 0
    %220 = vmatpush1.bf16.msra.mxu0 %v165
    %221 = vmatprep.subr.bf16.mxu0 0
    %222 = vmatpush1.bf16.msra.mxu0 %v166
    %223 = vmatprep.subr.bf16.mxu0 0
    %224 = vmatpush1.bf16.msra.mxu0 %v167
    %225 = vmatprep.subr.bf16.mxu0 0
    %226 = vmatpush1.bf16.msra.mxu0 %v168
    %227 = vmatprep.subr.bf16.mxu0 0
    %228 = vmatpush1.bf16.msra.mxu0 %v169
    %229 = vmatprep.subr.bf16.mxu0 0
    %230 = vmatpush1.bf16.msra.mxu0 %v170
    %231 = vmatprep.subr.bf16.mxu0 0
    %232 = vmatpush1.bf16.msra.mxu0 %v211
    %233 = vmatprep.subr.bf16.mxu0 0
    %234 = vmatpush1.bf16.msra.mxu0 0
    %235 = vmatprep.subr.bf16.mxu0 0
    %236 = vmatpush1.bf16.msra.mxu0 0
    %237 = vmatprep.subr.bf16.mxu0 0
    %238 = vmatpush1.bf16.msra.mxu0 0
    %239 = vmatprep.subr.bf16.mxu0 0
    %240 = vmatpush1.bf16.msra.mxu0 0
    %241 = vmatprep.subr.bf16.mxu0 0
    %242 = vmatpush1.bf16.msra.mxu0 0
    %243 = vmatprep.subr.bf16.mxu0 0
    %244 = vmatpush1.bf16.msra.mxu0 0
    %245 = vmatprep.mubr.bf16.mxu0 %v183
    %246 = vmatmul.mubr.bf16.gmra.mrb[0].mxu0 %v100
    %v247 = vpop.f32.mrb[0].mxu0
    %v248 = vadd.f32 0.0, %v247
    %v249 = vpop.f32.mrb[0].mxu0
    %v250 = vpop.f32.mrb[0].mxu0
    %v251 = vadd.f32 0.0, %v250
    %v252 = vpop.f32.mrb[0].mxu0
    %253 = vmatprep.mubr.bf16.mxu0 %v186
    %254 = vmatmul.mubr.bf16.gmra.mrb[0].mxu0 %v102
    %v255 = vpop.f32.mrb[0].mxu0
    %v256 = vadd.f32 0.0, %v255
    %v257 = vpop.f32.mrb[0].mxu0
    %v258 = vpop.f32.mrb[0].mxu0
    %v259 = vadd.f32 0.0, %v258
    %v260 = vpop.f32.mrb[0].mxu0
    %261 = vmatprep.mubr.bf16.mxu0 %v189
    %262 = vmatmul.mubr.bf16.gmra.mrb[0].mxu0 %v104
    %v263 = vpop.f32.mrb[0].mxu0
    %v264 = vadd.f32 0.0, %v263
    %v265 = vpop.f32.mrb[0].mxu0
    %v266 = vpop.f32.mrb[0].mxu0
    %v267 = vadd.f32 0.0, %v266
    %v268 = vpop.f32.mrb[0].mxu0
    %269 = vmatprep.mubr.bf16.mxu0 %v192
    %270 = vmatmul.mubr.bf16.gmra.mrb[0].mxu0 %v106
    %v271 = vpop.f32.mrb[0].mxu0
    %v272 = vadd.f32 0.0, %v271
    %v273 = vpop.f32.mrb[0].mxu0
    %v274 = vpop.f32.mrb[0].mxu0
    %v275 = vadd.f32 0.0, %v274
    %v276 = vpop.f32.mrb[0].mxu0
    %277 = vmatprep.mubr.bf16.mxu0 %v195
    %278 = vmatmul.mubr.bf16.gmra.mrb[0].mxu0 %v108
    %v279 = vpop.f32.mrb[0].mxu0
    %v280 = vadd.f32 0.0, %v279
    %v281 = vpop.f32.mrb[0].mxu0
    %v282 = vpop.f32.mrb[0].mxu0
    %v283 = vadd.f32 0.0, %v282
    %v284 = vpop.f32.mrb[0].mxu0
    %285 = vmatprep.mubr.bf16.mxu0 %v198
    %286 = vmatmul.mubr.bf16.gmra.mrb[0].mxu0 %v110
    %v287 = vpop.f32.mrb[0].mxu0
    %v288 = vadd.f32 0.0, %v287
    %v289 = vpop.f32.mrb[0].mxu0
    %v290 = vpop.f32.mrb[0].mxu0
    %v291 = vadd.f32 0.0, %v290
    %v292 = vpop.f32.mrb[0].mxu0
    %293 = vmatprep.mubr.bf16.mxu0 %v201
    %294 = vmatmul.mubr.bf16.gmra.mrb[0].mxu0 %v112
    %v295 = vpop.f32.mrb[0].mxu0
    %v296 = vadd.f32 0.0, %v295
    %v297 = vpop.f32.mrb[0].mxu0
    %v298 = vpop.f32.mrb[0].mxu0
    %v299 = vadd.f32 0.0, %v298
    %v300 = vpop.f32.mrb[0].mxu0
    %301 = vmatprep.mubr.bf16.mxu0 %v204
    %302 = vmatmul.mubr.bf16.gmra.mrb[0].mxu0 %v114
    %v303 = vpop.f32.mrb[0].mxu0
    %v304 = vadd.f32 0.0, %v303
    %v305 = vpop.f32.mrb[0].mxu0
    %v306 = vpop.f32.mrb[0].mxu0
    %v307 = vadd.f32 0.0, %v306
    %v308 = vpop.f32.mrb[0].mxu0
    %309 = vdwg.mxu0
    %vm310 = vcmask 523264
    %311 = vst.msk [vmem:[%s2] sm:$0xff] %vm310, %v248
    %312 = vst.msk [vmem:[%s2 + $0x8] sm:$0xff] %vm310, %v251
    %313 = vst.msk [vmem:[%s2 + $0x10] sm:$0xff] %vm310, %v256
    %314 = vst.msk [vmem:[%s2 + $0x18] sm:$0xff] %vm310, %v259
    %315 = vst.msk [vmem:[%s2 + $0x20] sm:$0xff] %vm310, %v264
    %316 = vst.msk [vmem:[%s2 + $0x28] sm:$0xff] %vm310, %v267
    %317 = vst.msk [vmem:[%s2 + $0x30] sm:$0xff] %vm310, %v272
    %318 = vst.msk [vmem:[%s2 + $0x38] sm:$0xff] %vm310, %v275
    %319 = vst.msk [vmem:[%s2 + $0x40] sm:$0xff] %vm310, %v280
    %320 = vst.msk [vmem:[%s2 + $0x48] sm:$0xff] %vm310, %v283
    %321 = vst.msk [vmem:[%s2 + $0x50] sm:$0xff] %vm310, %v288
    %322 = vst.msk [vmem:[%s2 + $0x58] sm:$0xff] %vm310, %v291
    %323 = vst.msk [vmem:[%s2 + $0x60] sm:$0xff] %vm310, %v296
    %324 = vst.msk [vmem:[%s2 + $0x68] sm:$0xff] %vm310, %v299
    %325 = vst.msk [vmem:[%s2 + $0x70] sm:$0xff] %vm310, %v304
    %326 = vst.msk [vmem:[%s2 + $0x78] sm:$0xff] %vm310, %v307
    %v327 = vlaneseq
    %v328 = vshrl.u32 %v327, 7
    %v329 = vadd.s32 %v328, 8
    %v330 = vadd.s32 %v328, 16
    %v331 = vadd.s32 %v328, 24
    %v332 = vadd.s32 %v328, 32
    %v333 = vadd.s32 %v328, 40
    %v334 = vadd.s32 %v328, 48
    %v335 = vadd.s32 %v328, 56
    %v336 = vadd.s32 %v328, 64
    %v337 = vadd.s32 %v328, 72
    %v338 = vadd.s32 %v328, 80
    %v339 = vadd.s32 %v328, 88
    %v340 = vadd.s32 %v328, 96
    %v341 = vadd.s32 %v328, 104
    %v342 = vadd.s32 %v328, 112
    %v343 = vadd.s32 %v328, 120
    %s344 = smul.u32 0, 128
    %v345 = vstv %s344
    %v346 = vadd.s32 %v328, %v345
    %v347 = vadd.s32 %v329, %v345
    %v348 = vadd.s32 %v330, %v345
    %v349 = vadd.s32 %v331, %v345
    %v350 = vadd.s32 %v332, %v345
    %v351 = vadd.s32 %v333, %v345
    %v352 = vadd.s32 %v334, %v345
    %v353 = vadd.s32 %v335, %v345
    %v354 = vadd.s32 %v336, %v345
    %v355 = vadd.s32 %v337, %v345
    %v356 = vadd.s32 %v338, %v345
    %v357 = vadd.s32 %v339, %v345
    %v358 = vadd.s32 %v340, %v345
    %v359 = vadd.s32 %v341, %v345
    %v360 = vadd.s32 %v342, %v345
    %v361 = vadd.s32 %v343, %v345
    %vm362 = vcmp.lt.s32.totalorder %v346, 128
    %vm363 = vcmp.lt.s32.totalorder %v347, 128
    %vm364 = vcmp.lt.s32.totalorder %v348, 128
    %vm365 = vcmp.lt.s32.totalorder %v349, 128
    %vm366 = vcmp.lt.s32.totalorder %v350, 128
    %vm367 = vcmp.lt.s32.totalorder %v351, 128
    %vm368 = vcmp.lt.s32.totalorder %v352, 128
    %vm369 = vcmp.lt.s32.totalorder %v353, 128
    %vm370 = vcmp.lt.s32.totalorder %v354, 128
    %vm371 = vcmp.lt.s32.totalorder %v355, 128
    %vm372 = vcmp.lt.s32.totalorder %v356, 128
    %vm373 = vcmp.lt.s32.totalorder %v357, 128
    %vm374 = vcmp.lt.s32.totalorder %v358, 128
    %vm375 = vcmp.lt.s32.totalorder %v359, 128
    %vm376 = vcmp.lt.s32.totalorder %v360, 128
    %vm377 = vcmp.lt.s32.totalorder %v361, 128
    %v378 = vsel %vm362, 1, 0
    %v379 = vsel %vm363, 1, 0
    %v380 = vsel %vm364, 1, 0
    %v381 = vsel %vm365, 1, 0
    %v382 = vsel %vm366, 1, 0
    %v383 = vsel %vm367, 1, 0
    %v384 = vsel %vm368, 1, 0
    %v385 = vsel %vm369, 1, 0
    %v386 = vsel %vm370, 1, 0
    %v387 = vsel %vm371, 1, 0
    %v388 = vsel %vm372, 1, 0
    %v389 = vsel %vm373, 1, 0
    %v390 = vsel %vm374, 1, 0
    %v391 = vsel %vm375, 1, 0
    %v392 = vsel %vm376, 1, 0
    %v393 = vsel %vm377, 1, 0
    %vm394 = vcmp.eq.s32.totalorder %v378, 1
    %vm395 = vcmp.eq.s32.totalorder %v379, 1
    %vm396 = vcmp.eq.s32.totalorder %v380, 1
    %vm397 = vcmp.eq.s32.totalorder %v381, 1
    %vm398 = vcmp.eq.s32.totalorder %v382, 1
    %vm399 = vcmp.eq.s32.totalorder %v383, 1
    %vm400 = vcmp.eq.s32.totalorder %v384, 1
    %vm401 = vcmp.eq.s32.totalorder %v385, 1
    %vm402 = vcmp.eq.s32.totalorder %v386, 1
    %vm403 = vcmp.eq.s32.totalorder %v387, 1
    %vm404 = vcmp.eq.s32.totalorder %v388, 1
    %vm405 = vcmp.eq.s32.totalorder %v389, 1
    %vm406 = vcmp.eq.s32.totalorder %v390, 1
    %vm407 = vcmp.eq.s32.totalorder %v391, 1
    %vm408 = vcmp.eq.s32.totalorder %v392, 1
    %vm409 = vcmp.eq.s32.totalorder %v393, 1
    %v410 = vsel %vm394, %v248, 0.0
    %v411 = vsel %vm395, %v251, 0.0
    %v412 = vsel %vm396, %v256, 0.0
    %v413 = vsel %vm397, %v259, 0.0
    %v414 = vsel %vm398, %v264, 0.0
    %v415 = vsel %vm399, %v267, 0.0
    %v416 = vsel %vm400, %v272, 0.0
    %v417 = vsel %vm401, %v275, 0.0
    %v418 = vsel %vm402, %v280, 0.0
    %v419 = vsel %vm403, %v283, 0.0
    %v420 = vsel %vm404, %v288, 0.0
    %v421 = vsel %vm405, %v291, 0.0
    %v422 = vsel %vm406, %v296, 0.0
    %v423 = vsel %vm407, %v299, 0.0
    %v424 = vsel %vm408, %v304, 0.0
    %v425 = vsel %vm409, %v307, 0.0
    %v426 = vsel %vm310, %v410, 0.0
    %v427 = vsel %vm310, %v411, 0.0
    %v428 = vadd.f32 %v426, %v427
    %v429 = vsel %vm310, %v412, 0.0
    %v430 = vadd.f32 %v428, %v429
    %v431 = vsel %vm310, %v413, 0.0
    %v432 = vadd.f32 %v430, %v431
    %v433 = vsel %vm310, %v414, 0.0
    %v434 = vadd.f32 %v432, %v433
    %v435 = vsel %vm310, %v415, 0.0
    %v436 = vadd.f32 %v434, %v435
    %v437 = vsel %vm310, %v416, 0.0
    %v438 = vadd.f32 %v436, %v437
    %v439 = vsel %vm310, %v417, 0.0
    %v440 = vadd.f32 %v438, %v439
    %v441 = vsel %vm310, %v418, 0.0
    %v442 = vadd.f32 %v440, %v441
    %v443 = vsel %vm310, %v419, 0.0
    %v444 = vadd.f32 %v442, %v443
    %v445 = vsel %vm310, %v420, 0.0
    %v446 = vadd.f32 %v444, %v445
    %v447 = vsel %vm310, %v421, 0.0
    %v448 = vadd.f32 %v446, %v447
    %v449 = vsel %vm310, %v422, 0.0
    %v450 = vadd.f32 %v448, %v449
    %v451 = vsel %vm310, %v423, 0.0
    %v452 = vadd.f32 %v450, %v451
    %v453 = vsel %vm310, %v424, 0.0
    %v454 = vadd.f32 %v452, %v453
    %v455 = vsel %vm310, %v425, 0.0
    %v456 = vadd.f32 %v454, %v455
    %v457 = vrot.slane %v456, 4
    %v458 = vadd.f32 %v456, %v457
    %v459 = vrot.slane %v458, 2
    %v460 = vadd.f32 %v458, %v459
    %v461 = vrot.slane %v460, 1
    %v462 = vadd.f32 %v460, %v461
    %v463 = vmul.f32 %v410, %v410
    %v464 = vmul.f32 %v411, %v411
    %v465 = vmul.f32 %v412, %v412
    %v466 = vmul.f32 %v413, %v413
    %v467 = vmul.f32 %v414, %v414
    %v468 = vmul.f32 %v415, %v415
    %v469 = vmul.f32 %v416, %v416
    %v470 = vmul.f32 %v417, %v417
    %v471 = vmul.f32 %v418, %v418
    %v472 = vmul.f32 %v419, %v419
    %v473 = vmul.f32 %v420, %v420
    %v474 = vmul.f32 %v421, %v421
    %v475 = vmul.f32 %v422, %v422
    %v476 = vmul.f32 %v423, %v423
    %v477 = vmul.f32 %v424, %v424
    %v478 = vmul.f32 %v425, %v425
    %v479 = vsel %vm310, %v463, 0.0
    %v480 = vsel %vm310, %v464, 0.0
    %v481 = vadd.f32 %v479, %v480
    %v482 = vsel %vm310, %v465, 0.0
    %v483 = vadd.f32 %v481, %v482
    %v484 = vsel %vm310, %v466, 0.0
    %v485 = vadd.f32 %v483, %v484
    %v486 = vsel %vm310, %v467, 0.0
    %v487 = vadd.f32 %v485, %v486
    %v488 = vsel %vm310, %v468, 0.0
    %v489 = vadd.f32 %v487, %v488
    %v490 = vsel %vm310, %v469, 0.0
    %v491 = vadd.f32 %v489, %v490
    %v492 = vsel %vm310, %v470, 0.0
    %v493 = vadd.f32 %v491, %v492
    %v494 = vsel %vm310, %v471, 0.0
    %v495 = vadd.f32 %v493, %v494
    %v496 = vsel %vm310, %v472, 0.0
    %v497 = vadd.f32 %v495, %v496
    %v498 = vsel %vm310, %v473, 0.0
    %v499 = vadd.f32 %v497, %v498
    %v500 = vsel %vm310, %v474, 0.0
    %v501 = vadd.f32 %v499, %v500
    %v502 = vsel %vm310, %v475, 0.0
    %v503 = vadd.f32 %v501, %v502
    %v504 = vsel %vm310, %v476, 0.0
    %v505 = vadd.f32 %v503, %v504
    %v506 = vsel %vm310, %v477, 0.0
    %v507 = vadd.f32 %v505, %v506
    %v508 = vsel %vm310, %v478, 0.0
    %v509 = vadd.f32 %v507, %v508
    %v510 = vrot.slane %v509, 4
    %v511 = vadd.f32 %v509, %v510
    %v512 = vrot.slane %v511, 2
    %v513 = vadd.f32 %v511, %v512
    %v514 = vrot.slane %v513, 1
    %v515 = vadd.f32 %v513, %v514
    %p516 = scmp.eq.s32.totalorder 0, 0
    // Predicated region
    $region10: #{tpu_custom_call.1} parent=1 // pred_check
      %p517 = pneg %p516
    $region11: #{tpu_custom_call.1} parent=1 // pred_check_branch
      %519 = sbr.rel (%p517) target = $region13
    $region12: #{tpu_custom_call.1} parent=1 // pred_region
      %vm520 = vcmask 516096
      %521 = vst.msk [vmem:[#allocation2] sm:$0x1] %vm520, %v462
      %522 = vst.msk [vmem:[#allocation4] sm:$0x1] %vm520, %v515
    $region13: #{tpu_custom_call.1} parent=1 // pred_fallthru
      _
    %p523 = scmp.ne.s32.totalorder 0, 0
    // Predicated region
    $region14: #{tpu_custom_call.1} parent=1 // pred_check
      %p524 = pneg %p523
    $region15: #{tpu_custom_call.1} parent=1 // pred_check_branch
      %526 = sbr.rel (%p524) target = $region17
    $region16: #{tpu_custom_call.1} parent=1 // pred_region
      %v527 = vld [vmem:[#allocation2] sm:$0x1]
      %v528 = vadd.f32 %v527, %v462
      %vm529 = vcmask 516096
      %530 = vst.msk [vmem:[#allocation2] sm:$0x1] %vm529, %v528
      %v531 = vld [vmem:[#allocation4] sm:$0x1]
      %v532 = vadd.f32 %v531, %v515
      %533 = vst.msk [vmem:[#allocation4] sm:$0x1] %vm529, %v532
    $region17: #{tpu_custom_call.1} parent=1 // pred_fallthru
      _
    // Predicated region
    $region18: #{tpu_custom_call.1} parent=1 // pred_check
      _
    $region19: #{tpu_custom_call.1} parent=1 // pred_check_branch
      %535 = sbr.rel (0) target = $region21
    $region20: #{tpu_custom_call.1} parent=1 // pred_region
      _
    $region21: #{tpu_custom_call.1} parent=1 // pred_fallthru
      _
    // Predicated region
    $region22: #{tpu_custom_call.1} parent=1 // pred_check
      _
    $region23: #{tpu_custom_call.1} parent=1 // pred_check_branch
      %537 = sbr.rel (0) target = $region25
    $region24: #{tpu_custom_call.1} parent=1 // pred_region
      %s539 = ssub.s32 16, 16
      %540 = vsyncadd [#allocation3], %s539
      %s542 = sshll.u32 [#allocation2], 4
      %s543 = int_to_ptr.vmem [resolvable:$true] %s542
      %545 = dma.vmem_to_hbm [thread:$0]  %s543, 16, %s3, [#allocation3]
    $region25: #{tpu_custom_call.1} parent=1 // pred_fallthru
      _
    // Predicated region
    $region26: #{tpu_custom_call.1} parent=1 // pred_check
      _
    $region27: #{tpu_custom_call.1} parent=1 // pred_check_branch
      %547 = sbr.rel (0) target = $region29
    $region28: #{tpu_custom_call.1} parent=1 // pred_region
      %s549 = ssub.s32 16, 16
      %550 = vsyncadd [#allocation5], %s549
      %s552 = sshll.u32 [#allocation4], 4
      %s553 = int_to_ptr.vmem [resolvable:$true] %s552
      %555 = dma.vmem_to_hbm [thread:$0]  %s553, 16, %s4, [#allocation5]
    $region29: #{tpu_custom_call.1} parent=1 // pred_fallthru
      _
    // Predicated region
    $region30: #{tpu_custom_call.1} parent=1 // pred_check
      _
    $region31: #{tpu_custom_call.1} parent=1 // pred_check_branch
      %557 = sbr.rel (0) target = $region33
    $region32: #{tpu_custom_call.1} parent=1 // pred_region
      _
    $region33: #{tpu_custom_call.1} parent=1 // pred_fallthru
      _
    // Predicated region
    $region34: #{tpu_custom_call.1} parent=1 // pred_check
      _
    $region35: #{tpu_custom_call.1} parent=1 // pred_check_branch
      %559 = sbr.rel (0) target = $region37
    $region36: #{tpu_custom_call.1} parent=1 // pred_region
      %560 = dma.done [#allocation3], 16
    $region37: #{tpu_custom_call.1} parent=1 // pred_fallthru
      _
    // Predicated region
    $region38: #{tpu_custom_call.1} parent=1 // pred_check
      _
    $region39: #{tpu_custom_call.1} parent=1 // pred_check_branch
      %562 = sbr.rel (0) target = $region41
    $region40: #{tpu_custom_call.1} parent=1 // pred_region
      %563 = dma.done [#allocation5], 16
    $region41: #{tpu_custom_call.1} parent=1 // pred_fallthru
      _
    %564 = vsyncpa [#allocation3], 1
    %565 = vsyncpa [#allocation5], 1

</llo_original>
